<compile_context>
chip_gen: v6e
topology: v6e:2x2x1
jax: 0.10.0
libtpu: 0.0.40
codegen_flags: <defaults>
</compile_context>

<pallas_src>
import functools
import math

import jax
import jax.numpy as jnp
from jax.experimental import pallas as pl
from jax.experimental.pallas import tpu as pltpu


def pma_kernel(x_ref, s_ref, p_ref, o_ref, *, num_heads):
    """One grid step = one batch element.

    x_ref: (1, N, D)   input set X[b]
    s_ref: (1, S, D)   learned seeds (shared across batch)
    p_ref: (4*D + 32, D) packed parameter slab:
             rows [0,D)      Wq^T   (so that y = x @ W + b)
             rows [D,2D)     Wk^T
             rows [2D,3D)    Wv^T
             rows [3D,4D)    Wo^T
             row  4D + 0     bq     (8-row aligned for clean sublane slices)
             row  4D + 8     bk
             row  4D + 16    bv
             row  4D + 24    bo
    o_ref: (1, S, D)   output H[b]
    """
    N = x_ref.shape[1]
    D = x_ref.shape[2]
    S = s_ref.shape[1]
    ds = D // num_heads
    scale = 1.0 / math.sqrt(ds)

    # --- parameter views (static, aligned ref slices) ---
    wq = p_ref[0 * D:1 * D, :]
    wk = p_ref[1 * D:2 * D, :]
    wv = p_ref[2 * D:3 * D, :]
    wo = p_ref[3 * D:4 * D, :]
    bq = p_ref[4 * D + 0:4 * D + 1, :]
    bk = p_ref[4 * D + 8:4 * D + 9, :]
    bv = p_ref[4 * D + 16:4 * D + 17, :]
    bo = p_ref[4 * D + 24:4 * D + 25, :]

    seeds = s_ref[0]            # (S, D)
    x = x_ref[0]                # (N, D)

    # --- input projections (fc_q on seeds, fc_k / fc_v on X) ---
    qp = jnp.dot(seeds, wq, preferred_element_type=jnp.float32) + bq   # (S, D)
    kp = jnp.dot(x, wk, preferred_element_type=jnp.float32) + bk       # (N, D)
    vp = jnp.dot(x, wv, preferred_element_type=jnp.float32) + bv       # (N, D)

    # --- multi-head attention (torch split(dim_split, 2) / cat(0) semantics) ---
    heads = []
    for h in range(num_heads):
        lo, hi = h * ds, (h + 1) * ds
        qh = qp[:, lo:hi]                                              # (S, ds)
        kh = kp[:, lo:hi]                                              # (N, ds)
        vh = vp[:, lo:hi]                                              # (N, ds)
        scores = jax.lax.dot_general(
            qh, kh, (((1,), (1,)), ((), ())),
            preferred_element_type=jnp.float32) * scale                # (S, N)
        m = jnp.max(scores, axis=-1, keepdims=True)
        e = jnp.exp(scores - m)
        a = e / jnp.sum(e, axis=-1, keepdims=True)                     # softmax over keys
        attn = jnp.dot(a, vh, preferred_element_type=jnp.float32)      # (S, ds)
        heads.append(qh + attn)                                        # Q_ + A @ V_
    hmat = jnp.concatenate(heads, axis=-1)                             # (S, D)

    # --- H = H + relu(fc_o(H)) (ln=False) ---
    ho = jnp.dot(hmat, wo, preferred_element_type=jnp.float32) + bo
    o_ref[0, :, :] = hmat + jnp.maximum(ho, 0.0)


def init_params(key, dim, num_heads, num_seeds):
    """Deterministic synthetic parameters, pre-packed into one VMEM slab."""
    del num_heads  # only affects the forward split, not parameter shapes
    ks = jax.random.split(key, 9)
    bound = 1.0 / math.sqrt(dim)

    def u(k, shape, b):
        return jax.random.uniform(k, shape, jnp.float32, -b, b)

    # Weights stored already transposed to (in, out) so the kernel does x @ W.
    wq = u(ks[0], (dim, dim), bound)
    wk = u(ks[1], (dim, dim), bound)
    wv = u(ks[2], (dim, dim), bound)
    wo = u(ks[3], (dim, dim), bound)
    bq = u(ks[4], (dim,), bound)
    bk = u(ks[5], (dim,), bound)
    bv = u(ks[6], (dim,), bound)
    bo = u(ks[7], (dim,), bound)
    s_bound = math.sqrt(6.0 / (num_seeds * dim + dim))   # xavier-uniform-ish
    S = u(ks[8], (1, num_seeds, dim), s_bound)

    slab = jnp.zeros((4 * dim + 32, dim), jnp.float32)
    slab = slab.at[0 * dim:1 * dim].set(wq)
    slab = slab.at[1 * dim:2 * dim].set(wk)
    slab = slab.at[2 * dim:3 * dim].set(wv)
    slab = slab.at[3 * dim:4 * dim].set(wo)
    slab = slab.at[4 * dim + 0].set(bq)
    slab = slab.at[4 * dim + 8].set(bk)
    slab = slab.at[4 * dim + 16].set(bv)
    slab = slab.at[4 * dim + 24].set(bo)
    return {"S": S, "slab": slab}


def pma_forward(X, params, *, num_heads):
    B, N, D = X.shape
    Sarr = params["S"]                 # (1, num_seeds, D)
    slab = params["slab"]              # (4*D + 32, D)
    num_seeds = Sarr.shape[1]
    rows = slab.shape[0]

    kernel = functools.partial(pma_kernel, num_heads=num_heads)

    ds = D // num_heads
    flops_per_b = 2 * (num_seeds * D * D          # q proj
                       + 2 * N * D * D            # k/v proj
                       + num_heads * 2 * num_seeds * N * ds  # scores + A@V
                       + num_seeds * D * D)       # fc_o
    cost = pl.CostEstimate(
        flops=int(B * flops_per_b),
        transcendentals=int(B * num_heads * num_seeds * N),
        bytes_accessed=int(4 * (X.size + Sarr.size + slab.size
                                + B * num_seeds * D)))

    return pl.pallas_call(
        kernel,
        out_shape=jax.ShapeDtypeStruct((B, num_seeds, D), jnp.float32),
        grid=(B,),
        in_specs=[
            pl.BlockSpec((1, N, D), lambda b: (b, 0, 0)),
            pl.BlockSpec((1, num_seeds, D), lambda b: (0, 0, 0)),
            pl.BlockSpec((rows, D), lambda b: (0, 0)),
        ],
        out_specs=pl.BlockSpec((1, num_seeds, D), lambda b: (b, 0, 0)),
        compiler_params=pltpu.CompilerParams(
            dimension_semantics=("parallel",)),
        cost_estimate=cost,
    )(X, Sarr, slab)


def pma_reference(X, params, *, num_heads):
    """Pure-JAX reference with identical semantics (for correctness check)."""
    B, N, D = X.shape
    Sarr, slab = params["S"], params["slab"]
    S = Sarr.shape[1]
    ds = D // num_heads
    scale = 1.0 / math.sqrt(ds)
    wq, wk, wv, wo = slab[0:D], slab[D:2 * D], slab[2 * D:3 * D], slab[3 * D:4 * D]
    bq, bk = slab[4 * D + 0], slab[4 * D + 8]
    bv, bo = slab[4 * D + 16], slab[4 * D + 24]

    Q = jnp.einsum("bsd,de->bse", jnp.broadcast_to(Sarr, (B, S, D)), wq) + bq
    K = jnp.einsum("bnd,de->bne", X, wk) + bk
    V = jnp.einsum("bnd,de->bne", X, wv) + bv
    Qh = Q.reshape(B, S, num_heads, ds).transpose(0, 2, 1, 3)
    Kh = K.reshape(B, N, num_heads, ds).transpose(0, 2, 1, 3)
    Vh = V.reshape(B, N, num_heads, ds).transpose(0, 2, 1, 3)
    scores = jnp.einsum("bhsd,bhnd->bhsn", Qh, Kh) * scale
    A = jax.nn.softmax(scores, axis=-1)
    O = Qh + jnp.einsum("bhsn,bhnd->bhsd", A, Vh)
    Hm = O.transpose(0, 2, 1, 3).reshape(B, S, D)
    return Hm + jax.nn.relu(jnp.einsum("bsd,de->bse", Hm, wo) + bo)


if __name__ == "__main__":
    key = jax.random.PRNGKey(0)
    B, N, D, NUM_HEADS, NUM_SEEDS = 2, 8, 32, 4, 4
    kx, kp = jax.random.split(key)

    X = jax.random.normal(kx, (B, N, D), jnp.float32)
    params = init_params(kp, D, NUM_HEADS, NUM_SEEDS)

    out = pma_forward(X, params, num_heads=NUM_HEADS)
    jax.block_until_ready(out)

    assert out.shape == (B, NUM_SEEDS, D), out.shape
    ref = pma_reference(X, params, num_heads=NUM_HEADS)
    assert bool(jnp.all(jnp.isfinite(out)))
    assert bool(jnp.allclose(out, ref, atol=1e-4, rtol=1e-4)), (
        float(jnp.max(jnp.abs(out - ref))))
    print("KERNEL_OK")
</pallas_src>

<mosaic_0001>
module attributes {stable_mosaic.version = 11 : i64} {
  func.func @pma_kernel(%arg0: i32, %arg1: memref<1x8x32xf32, #tpu.memory_space<vmem>>, %arg2: memref<1x4x32xf32, #tpu.memory_space<vmem>>, %arg3: memref<160x32xf32, #tpu.memory_space<vmem>>, %arg4: memref<1x4x32xf32, #tpu.memory_space<vmem>>) attributes {dimension_semantics = [#tpu.dimension_semantics<parallel>], iteration_bounds = array<i64: 2>, scalar_prefetch = 0 : i64, scratch_operands = 0 : i64, tpu.core_type = #tpu.core_type<tc>, window_params = [{transform_indices = @transform_0, window_bounds = array<i64: 1, 8, 32>}, {pipeline_mode = #tpu.pipeline_mode<synchronous>, transform_indices = @transform_1, window_bounds = array<i64: 1, 4, 32>}, {pipeline_mode = #tpu.pipeline_mode<synchronous>, transform_indices = @transform_2, window_bounds = array<i64: 160, 32>}, {transform_indices = @transform_3, window_bounds = array<i64: 1, 4, 32>}]} {
    %c0 = arith.constant 0 : index
    %c0_0 = arith.constant 0 : index
    %0 = vector.load %arg3[%c0, %c0_0] : memref<160x32xf32, #tpu.memory_space<vmem>>, vector<32x32xf32>
    %c32 = arith.constant 32 : index
    %c0_1 = arith.constant 0 : index
    %1 = vector.load %arg3[%c32, %c0_1] : memref<160x32xf32, #tpu.memory_space<vmem>>, vector<32x32xf32>
    %c64 = arith.constant 64 : index
    %c0_2 = arith.constant 0 : index
    %2 = vector.load %arg3[%c64, %c0_2] : memref<160x32xf32, #tpu.memory_space<vmem>>, vector<32x32xf32>
    %c96 = arith.constant 96 : index
    %c0_3 = arith.constant 0 : index
    %3 = vector.load %arg3[%c96, %c0_3] : memref<160x32xf32, #tpu.memory_space<vmem>>, vector<32x32xf32>
    %c128 = arith.constant 128 : index
    %c0_4 = arith.constant 0 : index
    %4 = vector.load %arg3[%c128, %c0_4] : memref<160x32xf32, #tpu.memory_space<vmem>>, vector<1x32xf32>
    %c136 = arith.constant 136 : index
    %c0_5 = arith.constant 0 : index
    %5 = vector.load %arg3[%c136, %c0_5] : memref<160x32xf32, #tpu.memory_space<vmem>>, vector<1x32xf32>
    %c144 = arith.constant 144 : index
    %c0_6 = arith.constant 0 : index
    %6 = vector.load %arg3[%c144, %c0_6] : memref<160x32xf32, #tpu.memory_space<vmem>>, vector<1x32xf32>
    %c152 = arith.constant 152 : index
    %c0_7 = arith.constant 0 : index
    %7 = vector.load %arg3[%c152, %c0_7] : memref<160x32xf32, #tpu.memory_space<vmem>>, vector<1x32xf32>
    %c0_8 = arith.constant 0 : index
    %c0_9 = arith.constant 0 : index
    %c0_10 = arith.constant 0 : index
    %8 = vector.load %arg2[%c0_8, %c0_9, %c0_10] : memref<1x4x32xf32, #tpu.memory_space<vmem>>, vector<1x4x32xf32>
    %9 = vector.shape_cast %8 : vector<1x4x32xf32> to vector<4x32xf32>
    %c0_11 = arith.constant 0 : index
    %c0_12 = arith.constant 0 : index
    %c0_13 = arith.constant 0 : index
    %10 = vector.load %arg1[%c0_11, %c0_12, %c0_13] : memref<1x8x32xf32, #tpu.memory_space<vmem>>, vector<1x8x32xf32>
    %11 = vector.shape_cast %10 : vector<1x8x32xf32> to vector<8x32xf32>
    %cst = arith.constant dense<0.000000e+00> : vector<4x32xf32>
    %12 = tpu.matmul %9, %0, %cst {dimension_numbers = #tpu.dot_dimension_numbers<[1], [0], [0], [1], [0, 0, 1, 1], [], []>} : vector<4x32xf32>, vector<32x32xf32>, vector<4x32xf32> -> vector<4x32xf32>
    %13 = vector.broadcast %4 : vector<1x32xf32> to vector<4x32xf32>
    %14 = arith.addf %12, %13 : vector<4x32xf32>
    %cst_14 = arith.constant dense<0.000000e+00> : vector<8x32xf32>
    %15 = tpu.matmul %11, %1, %cst_14 {dimension_numbers = #tpu.dot_dimension_numbers<[1], [0], [0], [1], [0, 0, 1, 1], [], []>} : vector<8x32xf32>, vector<32x32xf32>, vector<8x32xf32> -> vector<8x32xf32>
    %16 = vector.broadcast %5 : vector<1x32xf32> to vector<8x32xf32>
    %17 = arith.addf %15, %16 : vector<8x32xf32>
    %cst_15 = arith.constant dense<0.000000e+00> : vector<8x32xf32>
    %18 = tpu.matmul %11, %2, %cst_15 {dimension_numbers = #tpu.dot_dimension_numbers<[1], [0], [0], [1], [0, 0, 1, 1], [], []>} : vector<8x32xf32>, vector<32x32xf32>, vector<8x32xf32> -> vector<8x32xf32>
    %19 = vector.broadcast %6 : vector<1x32xf32> to vector<8x32xf32>
    %20 = arith.addf %18, %19 : vector<8x32xf32>
    %21 = vector.extract_strided_slice %14 {offsets = [0, 0], sizes = [4, 8], strides = [1, 1]} : vector<4x32xf32> to vector<4x8xf32>
    %22 = vector.extract_strided_slice %17 {offsets = [0, 0], sizes = [8, 8], strides = [1, 1]} : vector<8x32xf32> to vector<8x8xf32>
    %23 = vector.extract_strided_slice %20 {offsets = [0, 0], sizes = [8, 8], strides = [1, 1]} : vector<8x32xf32> to vector<8x8xf32>
    %cst_16 = arith.constant dense<0.000000e+00> : vector<4x8xf32>
    %24 = tpu.matmul %21, %22, %cst_16 {dimension_numbers = #tpu.dot_dimension_numbers<[1], [1], [0], [0], [0, 0, 1, 0], [], []>} : vector<4x8xf32>, vector<8x8xf32>, vector<4x8xf32> -> vector<4x8xf32>
    %cst_17 = arith.constant 0.353553385 : f32
    %25 = vector.broadcast %cst_17 : f32 to vector<4x8xf32>
    %26 = arith.mulf %24, %25 : vector<4x8xf32>
    %cst_18 = arith.constant dense<0xFF800000> : vector<4xf32>
    %27 = vector.multi_reduction <maximumf>, %26, %cst_18 [1] : vector<4x8xf32> to vector<4xf32>
    %28 = vector.shape_cast %27 : vector<4xf32> to vector<4x1xf32>
    %29 = vector.broadcast %28 : vector<4x1xf32> to vector<4x8xf32>
    %30 = arith.subf %26, %29 : vector<4x8xf32>
    %31 = math.exp %30 : vector<4x8xf32>
    %cst_19 = arith.constant dense<0.000000e+00> : vector<4xf32>
    %32 = vector.multi_reduction <add>, %31, %cst_19 [1] : vector<4x8xf32> to vector<4xf32>
    %33 = vector.shape_cast %32 : vector<4xf32> to vector<4x1xf32>
    %34 = vector.broadcast %33 : vector<4x1xf32> to vector<4x8xf32>
    %35 = arith.divf %31, %34 : vector<4x8xf32>
    %cst_20 = arith.constant dense<0.000000e+00> : vector<4x8xf32>
    %36 = tpu.matmul %35, %23, %cst_20 {dimension_numbers = #tpu.dot_dimension_numbers<[1], [0], [0], [1], [0, 0, 1, 1], [], []>} : vector<4x8xf32>, vector<8x8xf32>, vector<4x8xf32> -> vector<4x8xf32>
    %37 = arith.addf %21, %36 : vector<4x8xf32>
    %38 = vector.extract_strided_slice %14 {offsets = [0, 8], sizes = [4, 8], strides = [1, 1]} : vector<4x32xf32> to vector<4x8xf32>
    %39 = vector.extract_strided_slice %17 {offsets = [0, 8], sizes = [8, 8], strides = [1, 1]} : vector<8x32xf32> to vector<8x8xf32>
    %40 = vector.extract_strided_slice %20 {offsets = [0, 8], sizes = [8, 8], strides = [1, 1]} : vector<8x32xf32> to vector<8x8xf32>
    %cst_21 = arith.constant dense<0.000000e+00> : vector<4x8xf32>
    %41 = tpu.matmul %38, %39, %cst_21 {dimension_numbers = #tpu.dot_dimension_numbers<[1], [1], [0], [0], [0, 0, 1, 0], [], []>} : vector<4x8xf32>, vector<8x8xf32>, vector<4x8xf32> -> vector<4x8xf32>
    %cst_22 = arith.constant 0.353553385 : f32
    %42 = vector.broadcast %cst_22 : f32 to vector<4x8xf32>
    %43 = arith.mulf %41, %42 : vector<4x8xf32>
    %cst_23 = arith.constant dense<0xFF800000> : vector<4xf32>
    %44 = vector.multi_reduction <maximumf>, %43, %cst_23 [1] : vector<4x8xf32> to vector<4xf32>
    %45 = vector.shape_cast %44 : vector<4xf32> to vector<4x1xf32>
    %46 = vector.broadcast %45 : vector<4x1xf32> to vector<4x8xf32>
    %47 = arith.subf %43, %46 : vector<4x8xf32>
    %48 = math.exp %47 : vector<4x8xf32>
    %cst_24 = arith.constant dense<0.000000e+00> : vector<4xf32>
    %49 = vector.multi_reduction <add>, %48, %cst_24 [1] : vector<4x8xf32> to vector<4xf32>
    %50 = vector.shape_cast %49 : vector<4xf32> to vector<4x1xf32>
    %51 = vector.broadcast %50 : vector<4x1xf32> to vector<4x8xf32>
    %52 = arith.divf %48, %51 : vector<4x8xf32>
    %cst_25 = arith.constant dense<0.000000e+00> : vector<4x8xf32>
    %53 = tpu.matmul %52, %40, %cst_25 {dimension_numbers = #tpu.dot_dimension_numbers<[1], [0], [0], [1], [0, 0, 1, 1], [], []>} : vector<4x8xf32>, vector<8x8xf32>, vector<4x8xf32> -> vector<4x8xf32>
    %54 = arith.addf %38, %53 : vector<4x8xf32>
    %55 = vector.extract_strided_slice %14 {offsets = [0, 16], sizes = [4, 8], strides = [1, 1]} : vector<4x32xf32> to vector<4x8xf32>
    %56 = vector.extract_strided_slice %17 {offsets = [0, 16], sizes = [8, 8], strides = [1, 1]} : vector<8x32xf32> to vector<8x8xf32>
    %57 = vector.extract_strided_slice %20 {offsets = [0, 16], sizes = [8, 8], strides = [1, 1]} : vector<8x32xf32> to vector<8x8xf32>
    %cst_26 = arith.constant dense<0.000000e+00> : vector<4x8xf32>
    %58 = tpu.matmul %55, %56, %cst_26 {dimension_numbers = #tpu.dot_dimension_numbers<[1], [1], [0], [0], [0, 0, 1, 0], [], []>} : vector<4x8xf32>, vector<8x8xf32>, vector<4x8xf32> -> vector<4x8xf32>
    %cst_27 = arith.constant 0.353553385 : f32
    %59 = vector.broadcast %cst_27 : f32 to vector<4x8xf32>
    %60 = arith.mulf %58, %59 : vector<4x8xf32>
    %cst_28 = arith.constant dense<0xFF800000> : vector<4xf32>
    %61 = vector.multi_reduction <maximumf>, %60, %cst_28 [1] : vector<4x8xf32> to vector<4xf32>
    %62 = vector.shape_cast %61 : vector<4xf32> to vector<4x1xf32>
    %63 = vector.broadcast %62 : vector<4x1xf32> to vector<4x8xf32>
    %64 = arith.subf %60, %63 : vector<4x8xf32>
    %65 = math.exp %64 : vector<4x8xf32>
    %cst_29 = arith.constant dense<0.000000e+00> : vector<4xf32>
    %66 = vector.multi_reduction <add>, %65, %cst_29 [1] : vector<4x8xf32> to vector<4xf32>
    %67 = vector.shape_cast %66 : vector<4xf32> to vector<4x1xf32>
    %68 = vector.broadcast %67 : vector<4x1xf32> to vector<4x8xf32>
    %69 = arith.divf %65, %68 : vector<4x8xf32>
    %cst_30 = arith.constant dense<0.000000e+00> : vector<4x8xf32>
    %70 = tpu.matmul %69, %57, %cst_30 {dimension_numbers = #tpu.dot_dimension_numbers<[1], [0], [0], [1], [0, 0, 1, 1], [], []>} : vector<4x8xf32>, vector<8x8xf32>, vector<4x8xf32> -> vector<4x8xf32>
    %71 = arith.addf %55, %70 : vector<4x8xf32>
    %72 = vector.extract_strided_slice %14 {offsets = [0, 24], sizes = [4, 8], strides = [1, 1]} : vector<4x32xf32> to vector<4x8xf32>
    %73 = vector.extract_strided_slice %17 {offsets = [0, 24], sizes = [8, 8], strides = [1, 1]} : vector<8x32xf32> to vector<8x8xf32>
    %74 = vector.extract_strided_slice %20 {offsets = [0, 24], sizes = [8, 8], strides = [1, 1]} : vector<8x32xf32> to vector<8x8xf32>
    %cst_31 = arith.constant dense<0.000000e+00> : vector<4x8xf32>
    %75 = tpu.matmul %72, %73, %cst_31 {dimension_numbers = #tpu.dot_dimension_numbers<[1], [1], [0], [0], [0, 0, 1, 0], [], []>} : vector<4x8xf32>, vector<8x8xf32>, vector<4x8xf32> -> vector<4x8xf32>
    %cst_32 = arith.constant 0.353553385 : f32
    %76 = vector.broadcast %cst_32 : f32 to vector<4x8xf32>
    %77 = arith.mulf %75, %76 : vector<4x8xf32>
    %cst_33 = arith.constant dense<0xFF800000> : vector<4xf32>
    %78 = vector.multi_reduction <maximumf>, %77, %cst_33 [1] : vector<4x8xf32> to vector<4xf32>
    %79 = vector.shape_cast %78 : vector<4xf32> to vector<4x1xf32>
    %80 = vector.broadcast %79 : vector<4x1xf32> to vector<4x8xf32>
    %81 = arith.subf %77, %80 : vector<4x8xf32>
    %82 = math.exp %81 : vector<4x8xf32>
    %cst_34 = arith.constant dense<0.000000e+00> : vector<4xf32>
    %83 = vector.multi_reduction <add>, %82, %cst_34 [1] : vector<4x8xf32> to vector<4xf32>
    %84 = vector.shape_cast %83 : vector<4xf32> to vector<4x1xf32>
    %85 = vector.broadcast %84 : vector<4x1xf32> to vector<4x8xf32>
    %86 = arith.divf %82, %85 : vector<4x8xf32>
    %cst_35 = arith.constant dense<0.000000e+00> : vector<4x8xf32>
    %87 = tpu.matmul %86, %74, %cst_35 {dimension_numbers = #tpu.dot_dimension_numbers<[1], [0], [0], [1], [0, 0, 1, 1], [], []>} : vector<4x8xf32>, vector<8x8xf32>, vector<4x8xf32> -> vector<4x8xf32>
    %88 = arith.addf %72, %87 : vector<4x8xf32>
    %89 = tpu.concatenate %37, %54, %71, %88 in 1 : vector<4x8xf32>, vector<4x8xf32>, vector<4x8xf32>, vector<4x8xf32> -> vector<4x32xf32>
    %cst_36 = arith.constant dense<0.000000e+00> : vector<4x32xf32>
    %90 = tpu.matmul %89, %3, %cst_36 {dimension_numbers = #tpu.dot_dimension_numbers<[1], [0], [0], [1], [0, 0, 1, 1], [], []>} : vector<4x32xf32>, vector<32x32xf32>, vector<4x32xf32> -> vector<4x32xf32>
    %91 = vector.broadcast %7 : vector<1x32xf32> to vector<4x32xf32>
    %92 = arith.addf %90, %91 : vector<4x32xf32>
    %cst_37 = arith.constant 0.000000e+00 : f32
    %93 = vector.broadcast %cst_37 : f32 to vector<4x32xf32>
    %94 = arith.maximumf %92, %93 : vector<4x32xf32>
    %95 = arith.addf %89, %94 : vector<4x32xf32>
    %c0_38 = arith.constant 0 : index
    %c0_39 = arith.constant 0 : index
    %c0_40 = arith.constant 0 : index
    %96 = vector.load %arg4[%c0_38, %c0_39, %c0_40] : memref<1x4x32xf32, #tpu.memory_space<vmem>>, vector<1x4x32xf32>
    %97 = vector.shape_cast %96 : vector<1x4x32xf32> to vector<4x32xf32>
    %98 = vector.shape_cast %95 : vector<4x32xf32> to vector<1x4x32xf32>
    tpu.vector_store %arg4[%c0_38, %c0_39, %c0_40], %98 {strides = array<i32>} : memref<1x4x32xf32, #tpu.memory_space<vmem>>, vector<1x4x32xf32>,
    return
  }
  func.func @transform_0(%arg0: i32) -> (i32, i32, i32) {
    %c0_i32 = arith.constant 0 : i32
    %c0_i32_0 = arith.constant 0 : i32
    %c0_i32_1 = arith.constant 0 : i32
    return %arg0, %c0_i32, %c0_i32_0 : i32, i32, i32
  }
  func.func @transform_1(%arg0: i32) -> (i32, i32, i32) {
    %c0_i32 = arith.constant 0 : i32
    %c0_i32_0 = arith.constant 0 : i32
    %c0_i32_1 = arith.constant 0 : i32
    %c0_i32_2 = arith.constant 0 : i32
    return %c0_i32, %c0_i32_0, %c0_i32_1 : i32, i32, i32
  }
  func.func @transform_2(%arg0: i32) -> (i32, i32) {
    %c0_i32 = arith.constant 0 : i32
    %c0_i32_0 = arith.constant 0 : i32
    %c0_i32_1 = arith.constant 0 : i32
    return %c0_i32, %c0_i32_0 : i32, i32
  }
  func.func @transform_3(%arg0: i32) -> (i32, i32, i32) {
    %c0_i32 = arith.constant 0 : i32
    %c0_i32_0 = arith.constant 0 : i32
    %c0_i32_1 = arith.constant 0 : i32
    return %arg0, %c0_i32, %c0_i32_0 : i32, i32, i32
  }
}

</mosaic_0001>

<llo_original>
// kernel: tpu_custom_call.1
$region0: #{tpu_custom_call.1}
  #allocation0 [shape = 'u32[]', space=smem, size = 0x4, offset = 0x4, fixed_abs, tag = 'smem constant byte address 0x4 - core index']
  #allocation1 [shape = 'u32[144,128]{1,0:T(1,128)}', space=vmem, size = 0x12000, scoped, tag = 'internal scratch']
  %s0 = inlined_call_operand.vmem [shape: f32[2,8,32], index: 0, kind: input, shape index: {}]
  %s1 = inlined_call_operand.vmem [shape: f32[1,4,32], index: 1, kind: input, shape index: {}]
  %s2 = inlined_call_operand.vmem [shape: f32[160,32], index: 2, kind: input, shape index: {}]
  %s3 = inlined_call_operand.hbm [shape: f32[2,4,32], index: 3, kind: output, shape index: {}]
  %s4 = sld [smem:[#allocation0]]
  $region45: #{tpu_custom_call.1} parent=0
    _
  %s6 = ssub.s32 1, %s4
  %s7 = scalar_select 0, %s6, %s4
  $region1: #{tpu_custom_call.1} parent=0
    #allocation2 [shape = 'u8[4096]{0}', space=vmem, size = 0x1000, scoped, tag = 'output window, operand 0']
    #allocation3 [shape = 's32[2]{0}', space=sflag, size = 0x8, scoped, tag = 'scoped memory for tpu_custom_call.1']
    %8 = vsyncpa [#allocation3], 0
    %s9 = scalar_lea.sflag [#allocation3], 1
    %10 = vsyncpa %s9, 0
    loop: start=0, step=1, limit=4
    $region2: #{tpu_custom_call.1} parent=1 // loop_pre_header
      _
    $region3: #{tpu_custom_call.1} parent=1 // loop_header
      %s12 = sphi 0, %s16
      %p13 = scmp.ge.s32.totalorder %s12, 4
      %s22 = sphi 0, %s24
      %s25 = sphi 0, %s22
      %s26 = sphi 0, %s25
      %s42 = sphi 0, %s26
      %s46 = sphi 0, %s46
      %s48 = sphi 0, %s46
      %s49 = sphi 0, %s48
      %s63 = sphi 0, %s49
      %s67 = sphi 0, %s67
      %s69 = sphi 0, %s67
      %s70 = sphi 0, %s69
      %s84 = sphi 0, %s70
      %s90 = sphi 0, %s92
      %s93 = sphi 0, %s90
      %s94 = sphi 0, %s93
      %s110 = sphi 0, %s94
    $region4: #{tpu_custom_call.1} parent=1 // loop_header_branch
      %15 = sbr.rel (%p13) target = $region8
    $region5: #{tpu_custom_call.1} parent=1 // loop_body
      %s17 = ssub.s32 %s12, 1
      %s18 = ssub.s32 %s12, 2
      %s19 = sadd.s32 %s12, 1
      %s20 = ssub.s32 %s12, %s19
      %p21 = scmp.eq.s32.totalorder %s20, 0
      %s23 = sadd.s32 %s22, 1
      %s24 = scalar_select %p21, %s22, %s23
      %p27 = pneg %p21
      %p28 = scmp.eq.s32.totalorder %s12, 1
      %p29 = por %p27, %p28
      %p30 = scmp.ne.s32.totalorder %s22, %s25
      %p31 = scmp.eq.s32.totalorder %s12, 0
      %p32 = por %p30, %p31
      %p33 = scmp.ne.s32.totalorder %s22, %s25
      %p34 = scmp.eq.s32.totalorder %s17, 1
      %p35 = por %p33, %p34
      %p36 = scmp.ne.s32.totalorder %s25, %s26
      %p37 = scmp.eq.s32.totalorder %s17, 0
      %p38 = por %p36, %p37
      %p39 = scmp.ne.s32.totalorder %s25, %s26
      %p40 = scmp.eq.s32.totalorder %s18, 1
      %p41 = por %p39, %p40
      %p43 = scmp.ne.s32.totalorder %s26, %s42
      %p44 = scmp.eq.s32.totalorder %s18, 0
      %p45 = por %p43, %p44
      %s47 = sadd.s32 %s46, 1
      %p50 = scmp.eq.s32.totalorder %s12, 1
      %p51 = scmp.ne.s32.totalorder %s46, %s48
      %p52 = scmp.eq.s32.totalorder %s12, 0
      %p53 = por %p51, %p52
      %p54 = scmp.ne.s32.totalorder %s46, %s48
      %p55 = scmp.eq.s32.totalorder %s17, 1
      %p56 = por %p54, %p55
      %p57 = scmp.ne.s32.totalorder %s48, %s49
      %p58 = scmp.eq.s32.totalorder %s17, 0
      %p59 = por %p57, %p58
      %p60 = scmp.ne.s32.totalorder %s48, %s49
      %p61 = scmp.eq.s32.totalorder %s18, 1
      %p62 = por %p60, %p61
      %p64 = scmp.ne.s32.totalorder %s49, %s63
      %p65 = scmp.eq.s32.totalorder %s18, 0
      %p66 = por %p64, %p65
      %s68 = sadd.s32 %s67, 1
      %p71 = scmp.eq.s32.totalorder %s12, 1
      %p72 = scmp.ne.s32.totalorder %s67, %s69
      %p73 = scmp.eq.s32.totalorder %s12, 0
      %p74 = por %p72, %p73
      %p75 = scmp.ne.s32.totalorder %s67, %s69
      %p76 = scmp.eq.s32.totalorder %s17, 1
      %p77 = por %p75, %p76
      %p78 = scmp.ne.s32.totalorder %s69, %s70
      %p79 = scmp.eq.s32.totalorder %s17, 0
      %p80 = por %p78, %p79
      %p81 = scmp.ne.s32.totalorder %s69, %s70
      %p82 = scmp.eq.s32.totalorder %s18, 1
      %p83 = por %p81, %p82
      %p85 = scmp.ne.s32.totalorder %s70, %s84
      %p86 = scmp.eq.s32.totalorder %s18, 0
      %p87 = por %p85, %p86
      %s88 = ssub.s32 %s12, %s19
      %p89 = scmp.eq.s32.totalorder %s88, 0
      %s91 = sadd.s32 %s90, 1
      %s92 = scalar_select %p89, %s90, %s91
      %p95 = pneg %p89
      %p96 = scmp.eq.s32.totalorder %s12, 1
      %p97 = por %p95, %p96
      %p98 = scmp.ne.s32.totalorder %s90, %s93
      %p99 = scmp.eq.s32.totalorder %s12, 0
      %p100 = por %p98, %p99
      %p101 = scmp.ne.s32.totalorder %s90, %s93
      %p102 = scmp.eq.s32.totalorder %s17, 1
      %p103 = por %p101, %p102
      %p104 = scmp.ne.s32.totalorder %s93, %s94
      %p105 = scmp.eq.s32.totalorder %s17, 0
      %p106 = por %p104, %p105
      %p107 = scmp.ne.s32.totalorder %s93, %s94
      %p108 = scmp.eq.s32.totalorder %s18, 1
      %p109 = por %p107, %p108
      %p111 = scmp.ne.s32.totalorder %s94, %s110
      %p112 = scmp.eq.s32.totalorder %s18, 0
      %p113 = por %p111, %p112
      %p114 = scmp.le.s32.totalorder 1, %s12
      %p115 = scmp.lt.s32.totalorder %s12, 3
      %p116 = pnand %p114, %p115
      %p117 = pneg %p116
      // Predicated region
      $region9: #{tpu_custom_call.1} parent=5 // pred_check
        _
      $region10: #{tpu_custom_call.1} parent=5 // pred_check_branch
        %119 = sbr.rel (%p116) target = $region12
      $region11: #{tpu_custom_call.1} parent=5 // pred_region
        %s120 = ssub.s32 %s12, 1
        // Predicated region
        $region13: #{tpu_custom_call.1} parent=11 // pred_check
          %p121 = pneg %p59
        $region14: #{tpu_custom_call.1} parent=11 // pred_check_branch
          %123 = sbr.rel (%p121) target = $region16
        $region15: #{tpu_custom_call.1} parent=11 // pred_region
          _
        $region16: #{tpu_custom_call.1} parent=11 // pred_fallthru
          _
        // Predicated region
        $region17: #{tpu_custom_call.1} parent=11 // pred_check
          %p124 = pneg %p80
        $region18: #{tpu_custom_call.1} parent=11 // pred_check_branch
          %126 = sbr.rel (%p124) target = $region20
        $region19: #{tpu_custom_call.1} parent=11 // pred_region
          _
        $region20: #{tpu_custom_call.1} parent=11 // pred_fallthru
          _
      $region12: #{tpu_custom_call.1} parent=5 // pred_fallthru
        _
      %p127 = scmp.lt.s32.totalorder %s12, 2
      // Predicated region
      $region21: #{tpu_custom_call.1} parent=5 // pred_check
        %p128 = pneg %p127
      $region22: #{tpu_custom_call.1} parent=5 // pred_check_branch
        %130 = sbr.rel (%p128) target = $region24
      $region23: #{tpu_custom_call.1} parent=5 // pred_region
        // Predicated region
        $region25: #{tpu_custom_call.1} parent=23 // pred_check
          %p131 = pneg %p32
        $region26: #{tpu_custom_call.1} parent=23 // pred_check_branch
          %133 = sbr.rel (%p131) target = $region28
        $region27: #{tpu_custom_call.1} parent=23 // pred_region
          %p134 = scmp.lt.s32.totalorder %s12, 1
          %s135 = scalar_select %p134, %s12, 1
          %s136 = smul.addr %s135, 8
          %s137 = scalar_lea.vmem %s0, %s136
        $region28: #{tpu_custom_call.1} parent=23 // pred_fallthru
          _
      $region24: #{tpu_custom_call.1} parent=5 // pred_fallthru
        _
      %p138 = scmp.le.s32.totalorder 1, %s12
      %p139 = scmp.lt.s32.totalorder %s12, 3
      %p140 = pnand %p138, %p139
      %p141 = pneg %p140
      // Predicated region
      $region29: #{tpu_custom_call.1} parent=5 // pred_check
        _
      $region30: #{tpu_custom_call.1} parent=5 // pred_check_branch
        %143 = sbr.rel (%p140) target = $region32
      $region31: #{tpu_custom_call.1} parent=5 // pred_region
        %s144 = ssub.s32 %s12, 1
        %p145 = scmp.lt.s32.totalorder %s17, 1
        %s146 = scalar_select %p145, %s17, 1
        %s147 = smul.addr %s146, 8
        %s148 = scalar_lea.vmem %s0, %s147
        %p149 = pneg %p38
        %p150 = pneg %p35
        %p151 = pneg %p59
        %p152 = pneg %p56
        %p153 = pneg %p80
        %p154 = pneg %p77
        %p155 = pneg %p106
        %p156 = pneg %p103
        %s157 = sand.u32 %s93, 1
        %s158 = scalar_lea.sflag [#allocation3], %s157
        %s159 = sand.u32 %s93, 1
        %s160 = smul.addr %s159, 4
        %s161 = scalar_lea.vmem [#allocation2], %s160
        %p162 = scmp.lt.s32.totalorder %s17, 1
        %s163 = scalar_select %p162, %s17, 1
        %s164 = smul.addr %s163, 8
        %s165 = scalar_lea.vmem %s0, %s164
        %v166 = vld [vmem:[%s2] sm:$0xff]
        %v167 = vld [vmem:[%s2 + $0x8] sm:$0xff]
        %v168 = vld [vmem:[%s2 + $0x10] sm:$0xff]
        %v169 = vld [vmem:[%s2 + $0x18] sm:$0xff]
        %v170 = vld [vmem:[%s2 + $0x20] sm:$0xff]
        %v171 = vld [vmem:[%s2 + $0x28] sm:$0xff]
        %v172 = vld [vmem:[%s2 + $0x30] sm:$0xff]
        %v173 = vld [vmem:[%s2 + $0x38] sm:$0xff]
        %v174 = vld [vmem:[%s2 + $0x40] sm:$0xff]
        %v175 = vld [vmem:[%s2 + $0x48] sm:$0xff]
        %v176 = vld [vmem:[%s2 + $0x50] sm:$0xff]
        %v177 = vld [vmem:[%s2 + $0x58] sm:$0xff]
        %v178 = vld [vmem:[%s2 + $0x60] sm:$0xff]
        %v179 = vld [vmem:[%s2 + $0x68] sm:$0xff]
        %v180 = vld [vmem:[%s2 + $0x70] sm:$0xff]
        %v181 = vld [vmem:[%s2 + $0x78] sm:$0xff]
        %v182 = vld [vmem:[%s2 + $0x80] sm:$0x1]
        %v183 = vld [vmem:[%s2 + $0x88] sm:$0x1]
        %v184 = vld [vmem:[%s2 + $0x90] sm:$0x1]
        %v185 = vld [vmem:[%s2 + $0x98] sm:$0x1]
        %v186 = vld [vmem:[%s1] sm:$0xf]
        %v187 = vld [vmem:[%s165] sm:$0xff]
        %v188 = vlaneseq
        %v189 = vshrl.u32 %v188, 7
        %v190 = vsub.s32 0, %v189
        %v191 = vrot.slane %v182, %v190
        %vm192 = vcmask 261120
        %v194 = vsel %vm192, %v186, 0
        %196 = vmatprep.subr.mxu0 0.0
        %197 = vmatpush1.msra.mxu0 0.0
        %198 = vmatprep.subr.mxu0 0.0
        %199 = vmatpush1.msra.mxu0 0.0
        %200 = vmatprep.subr.mxu0 0.0
        %201 = vmatpush1.msra.mxu0 0.0
        %202 = vmatprep.subr.mxu0 0.0
        %203 = vmatpush1.msra.mxu0 0.0
        %204 = vmatprep.subr.mxu0 0.0
        %205 = vmatpush1.msra.mxu0 0.0
        %206 = vmatprep.subr.mxu0 0.0
        %207 = vmatpush1.msra.mxu0 0.0
        %208 = vmatprep.subr.mxu0 0.0
        %209 = vmatpush1.msra.mxu0 0.0
        %210 = vmatprep.subr.mxu0 0.0
        %211 = vmatpush1.msra.mxu0 0.0
        %212 = vmatprep.subr.mxu0 0.0
        %213 = vmatpush1.msra.mxu0 0.0
        %214 = vmatprep.subr.mxu0 0.0
        %215 = vmatpush1.msra.mxu0 0.0
        %216 = vmatprep.subr.mxu0 0.0
        %217 = vmatpush1.msra.mxu0 0.0
        %218 = vmatprep.subr.mxu0 0.0
        %219 = vmatpush1.msra.mxu0 0.0
        %220 = vmatprep.subr.mxu0 0.0
        %221 = vmatpush1.msra.mxu0 %v169
        %222 = vmatprep.subr.mxu0 0.0
        %223 = vmatpush1.msra.mxu0 %v168
        %224 = vmatprep.subr.mxu0 0.0
        %225 = vmatpush1.msra.mxu0 %v167
        %226 = vmatprep.subr.mxu0 0.0
        %227 = vmatpush1.msra.mxu0 %v166
        %228 = vmatprep.subr.mxu0 0.0
        %229 = vmatpush2.msra.mxu0 0.0
        %230 = vmatprep.subr.mxu0 0.0
        %231 = vmatpush2.msra.mxu0 0.0
        %232 = vmatprep.subr.mxu0 0.0
        %233 = vmatpush2.msra.mxu0 0.0
        %234 = vmatprep.subr.mxu0 0.0
        %235 = vmatpush2.msra.mxu0 0.0
        %236 = vmatprep.subr.mxu0 0.0
        %237 = vmatpush2.msra.mxu0 0.0
        %238 = vmatprep.subr.mxu0 0.0
        %239 = vmatpush2.msra.mxu0 0.0
        %240 = vmatprep.subr.mxu0 0.0
        %241 = vmatpush2.msra.mxu0 0.0
        %242 = vmatprep.subr.mxu0 0.0
        %243 = vmatpush2.msra.mxu0 0.0
        %244 = vmatprep.subr.mxu0 0.0
        %245 = vmatpush2.msra.mxu0 0.0
        %246 = vmatprep.subr.mxu0 0.0
        %247 = vmatpush2.msra.mxu0 0.0
        %248 = vmatprep.subr.mxu0 0.0
        %249 = vmatpush2.msra.mxu0 0.0
        %250 = vmatprep.subr.mxu0 0.0
        %251 = vmatpush2.msra.mxu0 0.0
        %252 = vmatprep.subr.mxu0 0.0
        %253 = vmatpush2.msra.mxu0 0.0
        %254 = vmatprep.subr.mxu0 0.0
        %255 = vmatpush2.msra.mxu0 0.0
        %256 = vmatprep.subr.mxu0 0.0
        %257 = vmatpush2.msra.mxu0 0.0
        %258 = vmatprep.subr.mxu0 0.0
        %259 = vmatpush2.msra.mxu0 0.0
        %260 = vmatprep.mubr.f32.mxu0 0.0
        %261 = vmatmul.mubr.f32.gmra.mxu0 %v194
        %v262 = vpop.f32.mrf.mxu0
        %v263 = vadd.f32 %v191, %v262
        %v264 = vpop.f32.mrf.mxu0
        %265 = vdwg.mxu0
        %v266 = vlaneseq
        %v267 = vshrl.u32 %v266, 7
        %v268 = vsub.s32 0, %v267
        %v269 = vrot.slane %v183, %v268
        %v271 = vsel %vm192, %v187, 0
        %273 = vmatprep.subr.mxu0 0.0
        %274 = vmatpush1.msra.mxu0 0.0
        %275 = vmatprep.subr.mxu0 0.0
        %276 = vmatpush1.msra.mxu0 0.0
        %277 = vmatprep.subr.mxu0 0.0
        %278 = vmatpush1.msra.mxu0 0.0
        %279 = vmatprep.subr.mxu0 0.0
        %280 = vmatpush1.msra.mxu0 0.0
        %281 = vmatprep.subr.mxu0 0.0
        %282 = vmatpush1.msra.mxu0 0.0
        %283 = vmatprep.subr.mxu0 0.0
        %284 = vmatpush1.msra.mxu0 0.0
        %285 = vmatprep.subr.mxu0 0.0
        %286 = vmatpush1.msra.mxu0 0.0
        %287 = vmatprep.subr.mxu0 0.0
        %288 = vmatpush1.msra.mxu0 0.0
        %289 = vmatprep.subr.mxu0 0.0
        %290 = vmatpush1.msra.mxu0 0.0
        %291 = vmatprep.subr.mxu0 0.0
        %292 = vmatpush1.msra.mxu0 0.0
        %293 = vmatprep.subr.mxu0 0.0
        %294 = vmatpush1.msra.mxu0 0.0
        %295 = vmatprep.subr.mxu0 0.0
        %296 = vmatpush1.msra.mxu0 0.0
        %297 = vmatprep.subr.mxu0 0.0
        %298 = vmatpush1.msra.mxu0 %v173
        %299 = vmatprep.subr.mxu0 0.0
        %300 = vmatpush1.msra.mxu0 %v172
        %301 = vmatprep.subr.mxu0 0.0
        %302 = vmatpush1.msra.mxu0 %v171
        %303 = vmatprep.subr.mxu0 0.0
        %304 = vmatpush1.msra.mxu0 %v170
        %305 = vmatprep.subr.mxu0 0.0
        %306 = vmatpush2.msra.mxu0 0.0
        %307 = vmatprep.subr.mxu0 0.0
        %308 = vmatpush2.msra.mxu0 0.0
        %309 = vmatprep.subr.mxu0 0.0
        %310 = vmatpush2.msra.mxu0 0.0
        %311 = vmatprep.subr.mxu0 0.0
        %312 = vmatpush2.msra.mxu0 0.0
        %313 = vmatprep.subr.mxu0 0.0
        %314 = vmatpush2.msra.mxu0 0.0
        %315 = vmatprep.subr.mxu0 0.0
        %316 = vmatpush2.msra.mxu0 0.0
        %317 = vmatprep.subr.mxu0 0.0
        %318 = vmatpush2.msra.mxu0 0.0
        %319 = vmatprep.subr.mxu0 0.0
        %320 = vmatpush2.msra.mxu0 0.0
        %321 = vmatprep.subr.mxu0 0.0
        %322 = vmatpush2.msra.mxu0 0.0
        %323 = vmatprep.subr.mxu0 0.0
        %324 = vmatpush2.msra.mxu0 0.0
        %325 = vmatprep.subr.mxu0 0.0
        %326 = vmatpush2.msra.mxu0 0.0
        %327 = vmatprep.subr.mxu0 0.0
        %328 = vmatpush2.msra.mxu0 0.0
        %329 = vmatprep.subr.mxu0 0.0
        %330 = vmatpush2.msra.mxu0 0.0
        %331 = vmatprep.subr.mxu0 0.0
        %332 = vmatpush2.msra.mxu0 0.0
        %333 = vmatprep.subr.mxu0 0.0
        %334 = vmatpush2.msra.mxu0 0.0
        %335 = vmatprep.subr.mxu0 0.0
        %336 = vmatpush2.msra.mxu0 0.0
        %337 = vmatprep.mubr.f32.mxu0 0.0
        %338 = vmatmul.mubr.f32.gmra.mxu0 %v271
        %v339 = vpop.f32.mrf.mxu0
        %v340 = vadd.f32 %v269, %v339
        %v341 = vpop.f32.mrf.mxu0
        %342 = vdwg.mxu0
        %v343 = vlaneseq
        %v344 = vshrl.u32 %v343, 7
        %v345 = vsub.s32 0, %v344
        %v346 = vrot.slane %v184, %v345
        %347 = vmatprep.subr.mxu0 0.0
        %348 = vmatpush1.msra.mxu0 0.0
        %349 = vmatprep.subr.mxu0 0.0
        %350 = vmatpush1.msra.mxu0 0.0
        %351 = vmatprep.subr.mxu0 0.0
        %352 = vmatpush1.msra.mxu0 0.0
        %353 = vmatprep.subr.mxu0 0.0
        %354 = vmatpush1.msra.mxu0 0.0
        %355 = vmatprep.subr.mxu0 0.0
        %356 = vmatpush1.msra.mxu0 0.0
        %357 = vmatprep.subr.mxu0 0.0
        %358 = vmatpush1.msra.mxu0 0.0
        %359 = vmatprep.subr.mxu0 0.0
        %360 = vmatpush1.msra.mxu0 0.0
        %361 = vmatprep.subr.mxu0 0.0
        %362 = vmatpush1.msra.mxu0 0.0
        %363 = vmatprep.subr.mxu0 0.0
        %364 = vmatpush1.msra.mxu0 0.0
        %365 = vmatprep.subr.mxu0 0.0
        %366 = vmatpush1.msra.mxu0 0.0
        %367 = vmatprep.subr.mxu0 0.0
        %368 = vmatpush1.msra.mxu0 0.0
        %369 = vmatprep.subr.mxu0 0.0
        %370 = vmatpush1.msra.mxu0 0.0
        %371 = vmatprep.subr.mxu0 0.0
        %372 = vmatpush1.msra.mxu0 %v177
        %373 = vmatprep.subr.mxu0 0.0
        %374 = vmatpush1.msra.mxu0 %v176
        %375 = vmatprep.subr.mxu0 0.0
        %376 = vmatpush1.msra.mxu0 %v175
        %377 = vmatprep.subr.mxu0 0.0
        %378 = vmatpush1.msra.mxu0 %v174
        %379 = vmatprep.subr.mxu0 0.0
        %380 = vmatpush2.msra.mxu0 0.0
        %381 = vmatprep.subr.mxu0 0.0
        %382 = vmatpush2.msra.mxu0 0.0
        %383 = vmatprep.subr.mxu0 0.0
        %384 = vmatpush2.msra.mxu0 0.0
        %385 = vmatprep.subr.mxu0 0.0
        %386 = vmatpush2.msra.mxu0 0.0
        %387 = vmatprep.subr.mxu0 0.0
        %388 = vmatpush2.msra.mxu0 0.0
        %389 = vmatprep.subr.mxu0 0.0
        %390 = vmatpush2.msra.mxu0 0.0
        %391 = vmatprep.subr.mxu0 0.0
        %392 = vmatpush2.msra.mxu0 0.0
        %393 = vmatprep.subr.mxu0 0.0
        %394 = vmatpush2.msra.mxu0 0.0
        %395 = vmatprep.subr.mxu0 0.0
        %396 = vmatpush2.msra.mxu0 0.0
        %397 = vmatprep.subr.mxu0 0.0
        %398 = vmatpush2.msra.mxu0 0.0
        %399 = vmatprep.subr.mxu0 0.0
        %400 = vmatpush2.msra.mxu0 0.0
        %401 = vmatprep.subr.mxu0 0.0
        %402 = vmatpush2.msra.mxu0 0.0
        %403 = vmatprep.subr.mxu0 0.0
        %404 = vmatpush2.msra.mxu0 0.0
        %405 = vmatprep.subr.mxu0 0.0
        %406 = vmatpush2.msra.mxu0 0.0
        %407 = vmatprep.subr.mxu0 0.0
        %408 = vmatpush2.msra.mxu0 0.0
        %409 = vmatprep.subr.mxu0 0.0
        %410 = vmatpush2.msra.mxu0 0.0
        %411 = vmatprep.mubr.f32.mxu0 0.0
        %412 = vmatmul.mubr.f32.gmra.mxu0 %v271
        %v413 = vpop.f32.mrf.mxu0
        %v414 = vadd.f32 %v346, %v413
        %v415 = vpop.f32.mrf.mxu0
        %416 = vdwg.mxu0
        %vm417 = vcmask 64512
        %v419 = vsel %vm417, %v263, 0
        %v422 = vsel %vm417, %v340, 0
        %424 = vmatprep.subr.mxu0 0.0
        %425 = vmatpush1.xpose.msra.mxu0 0.0
        %426 = vmatprep.subr.mxu0 0.0
        %427 = vmatpush1.xpose.msra.mxu0 0.0
        %428 = vmatprep.subr.mxu0 0.0
        %429 = vmatpush1.xpose.msra.mxu0 0.0
        %430 = vmatprep.subr.mxu0 0.0
        %431 = vmatpush1.xpose.msra.mxu0 0.0
        %432 = vmatprep.subr.mxu0 0.0
        %433 = vmatpush1.xpose.msra.mxu0 0.0
        %434 = vmatprep.subr.mxu0 0.0
        %435 = vmatpush1.xpose.msra.mxu0 0.0
        %436 = vmatprep.subr.mxu0 0.0
        %437 = vmatpush1.xpose.msra.mxu0 0.0
        %438 = vmatprep.subr.mxu0 0.0
        %439 = vmatpush1.xpose.msra.mxu0 0.0
        %440 = vmatprep.subr.mxu0 0.0
        %441 = vmatpush1.xpose.msra.mxu0 0.0
        %442 = vmatprep.subr.mxu0 0.0
        %443 = vmatpush1.xpose.msra.mxu0 0.0
        %444 = vmatprep.subr.mxu0 0.0
        %445 = vmatpush1.xpose.msra.mxu0 0.0
        %446 = vmatprep.subr.mxu0 0.0
        %447 = vmatpush1.xpose.msra.mxu0 0.0
        %448 = vmatprep.subr.mxu0 0.0
        %449 = vmatpush1.xpose.msra.mxu0 0.0
        %450 = vmatprep.subr.mxu0 0.0
        %451 = vmatpush1.xpose.msra.mxu0 0.0
        %452 = vmatprep.subr.mxu0 0.0
        %453 = vmatpush1.xpose.msra.mxu0 0.0
        %454 = vmatprep.subr.mxu0 0.0
        %455 = vmatpush1.xpose.msra.mxu0 %v422
        %456 = vmatprep.subr.mxu0 0.0
        %457 = vmatpush2.xpose.msra.mxu0 0.0
        %458 = vmatprep.subr.mxu0 0.0
        %459 = vmatpush2.xpose.msra.mxu0 0.0
        %460 = vmatprep.subr.mxu0 0.0
        %461 = vmatpush2.xpose.msra.mxu0 0.0
        %462 = vmatprep.subr.mxu0 0.0
        %463 = vmatpush2.xpose.msra.mxu0 0.0
        %464 = vmatprep.subr.mxu0 0.0
        %465 = vmatpush2.xpose.msra.mxu0 0.0
        %466 = vmatprep.subr.mxu0 0.0
        %467 = vmatpush2.xpose.msra.mxu0 0.0
        %468 = vmatprep.subr.mxu0 0.0
        %469 = vmatpush2.xpose.msra.mxu0 0.0
        %470 = vmatprep.subr.mxu0 0.0
        %471 = vmatpush2.xpose.msra.mxu0 0.0
        %472 = vmatprep.subr.mxu0 0.0
        %473 = vmatpush2.xpose.msra.mxu0 0.0
        %474 = vmatprep.subr.mxu0 0.0
        %475 = vmatpush2.xpose.msra.mxu0 0.0
        %476 = vmatprep.subr.mxu0 0.0
        %477 = vmatpush2.xpose.msra.mxu0 0.0
        %478 = vmatprep.subr.mxu0 0.0
        %479 = vmatpush2.xpose.msra.mxu0 0.0
        %480 = vmatprep.subr.mxu0 0.0
        %481 = vmatpush2.xpose.msra.mxu0 0.0
        %482 = vmatprep.subr.mxu0 0.0
        %483 = vmatpush2.xpose.msra.mxu0 0.0
        %484 = vmatprep.subr.mxu0 0.0
        %485 = vmatpush2.xpose.msra.mxu0 0.0
        %486 = vmatprep.subr.mxu0 0.0
        %487 = vmatpush2.xpose.msra.mxu0 0.0
        %488 = vmatprep.mubr.f32.mxu0 0.0
        %489 = vmatmul.mubr.f32.gmra.mxu0 %v419
        %v490 = vpop.f32.mrf.mxu0
        %v491 = vadd.f32 0.0, %v490
        %v492 = vpop.f32.mrf.mxu0
        %493 = vdwg.mxu0
        %v494 = vmul.f32 %v491, 0.35355338
        %vm495 = vcmask 60416
        %v496 = vsel %vm495, %v494, -inf
        %497 = vmax.xlane.f32.xlu0 %v496
        %v498 = vpop.xlane.xlu0 %497
        %v499 = vsub.f32 %v494, %v498
        %v500 = vmul.f32 %v499, 1.442695
        %v501 = vpow.pop %v500
        %v502 = vsel %vm495, %v501, 0.0
        %503 = vadd.xlane.f32.xlu0 %v502
        %v504 = vpop.xlane.xlu0 %503
        %v505 = vrcp.pop %v504
        %v506 = vmul.f32 %v501, %v505
        %v508 = vsel %vm417, %v506, 0
        %510 = vmatprep.subr.mxu0 0.0
        %511 = vmatpush1.msra.mxu0 0.0
        %512 = vmatprep.subr.mxu0 0.0
        %513 = vmatpush1.msra.mxu0 0.0
        %514 = vmatprep.subr.mxu0 0.0
        %515 = vmatpush1.msra.mxu0 0.0
        %516 = vmatprep.subr.mxu0 0.0
        %517 = vmatpush1.msra.mxu0 0.0
        %518 = vmatprep.subr.mxu0 0.0
        %519 = vmatpush1.msra.mxu0 0.0
        %520 = vmatprep.subr.mxu0 0.0
        %521 = vmatpush1.msra.mxu0 0.0
        %522 = vmatprep.subr.mxu0 0.0
        %523 = vmatpush1.msra.mxu0 0.0
        %524 = vmatprep.subr.mxu0 0.0
        %525 = vmatpush1.msra.mxu0 0.0
        %526 = vmatprep.subr.mxu0 0.0
        %527 = vmatpush1.msra.mxu0 0.0
        %528 = vmatprep.subr.mxu0 0.0
        %529 = vmatpush1.msra.mxu0 0.0
        %530 = vmatprep.subr.mxu0 0.0
        %531 = vmatpush1.msra.mxu0 0.0
        %532 = vmatprep.subr.mxu0 0.0
        %533 = vmatpush1.msra.mxu0 0.0
        %534 = vmatprep.subr.mxu0 0.0
        %535 = vmatpush1.msra.mxu0 0.0
        %536 = vmatprep.subr.mxu0 0.0
        %537 = vmatpush1.msra.mxu0 0.0
        %538 = vmatprep.subr.mxu0 0.0
        %539 = vmatpush1.msra.mxu0 0.0
        %540 = vmatprep.subr.mxu0 0.0
        %541 = vmatpush1.msra.mxu0 %v414
        %542 = vmatprep.subr.mxu0 0.0
        %543 = vmatpush2.msra.mxu0 0.0
        %544 = vmatprep.subr.mxu0 0.0
        %545 = vmatpush2.msra.mxu0 0.0
        %546 = vmatprep.subr.mxu0 0.0
        %547 = vmatpush2.msra.mxu0 0.0
        %548 = vmatprep.subr.mxu0 0.0
        %549 = vmatpush2.msra.mxu0 0.0
        %550 = vmatprep.subr.mxu0 0.0
        %551 = vmatpush2.msra.mxu0 0.0
        %552 = vmatprep.subr.mxu0 0.0
        %553 = vmatpush2.msra.mxu0 0.0
        %554 = vmatprep.subr.mxu0 0.0
        %555 = vmatpush2.msra.mxu0 0.0
        %556 = vmatprep.subr.mxu0 0.0
        %557 = vmatpush2.msra.mxu0 0.0
        %558 = vmatprep.subr.mxu0 0.0
        %559 = vmatpush2.msra.mxu0 0.0
        %560 = vmatprep.subr.mxu0 0.0
        %561 = vmatpush2.msra.mxu0 0.0
        %562 = vmatprep.subr.mxu0 0.0
        %563 = vmatpush2.msra.mxu0 0.0
        %564 = vmatprep.subr.mxu0 0.0
        %565 = vmatpush2.msra.mxu0 0.0
        %566 = vmatprep.subr.mxu0 0.0
        %567 = vmatpush2.msra.mxu0 0.0
        %568 = vmatprep.subr.mxu0 0.0
        %569 = vmatpush2.msra.mxu0 0.0
        %570 = vmatprep.subr.mxu0 0.0
        %571 = vmatpush2.msra.mxu0 0.0
        %572 = vmatprep.subr.mxu0 0.0
        %573 = vmatpush2.msra.mxu0 0.0
        %574 = vmatprep.mubr.f32.mxu0 0.0
        %575 = vmatmul.mubr.f32.gmra.mxu0 %v508
        %v576 = vpop.f32.mrf.mxu0
        %v577 = vadd.f32 0.0, %v576
        %v578 = vpop.f32.mrf.mxu0
        %579 = vdwg.mxu0
        %v580 = vadd.f32 %v263, %v577
        %581 = vrot.lane.b32.xlu0 %v263, 120
        %v582 = vpop.permute.xlu0 %581
        %583 = vrot.lane.b32.xlu0 %v340, 120
        %v584 = vpop.permute.xlu0 %583
        %v585 = vsel %vm417, %v582, 0
        %v587 = vsel %vm417, %v584, 0
        %589 = vmatprep.subr.mxu0 0.0
        %590 = vmatpush1.xpose.msra.mxu0 0.0
        %591 = vmatprep.subr.mxu0 0.0
        %592 = vmatpush1.xpose.msra.mxu0 0.0
        %593 = vmatprep.subr.mxu0 0.0
        %594 = vmatpush1.xpose.msra.mxu0 0.0
        %595 = vmatprep.subr.mxu0 0.0
        %596 = vmatpush1.xpose.msra.mxu0 0.0
        %597 = vmatprep.subr.mxu0 0.0
        %598 = vmatpush1.xpose.msra.mxu0 0.0
        %599 = vmatprep.subr.mxu0 0.0
        %600 = vmatpush1.xpose.msra.mxu0 0.0
        %601 = vmatprep.subr.mxu0 0.0
        %602 = vmatpush1.xpose.msra.mxu0 0.0
        %603 = vmatprep.subr.mxu0 0.0
        %604 = vmatpush1.xpose.msra.mxu0 0.0
        %605 = vmatprep.subr.mxu0 0.0
        %606 = vmatpush1.xpose.msra.mxu0 0.0
        %607 = vmatprep.subr.mxu0 0.0
        %608 = vmatpush1.xpose.msra.mxu0 0.0
        %609 = vmatprep.subr.mxu0 0.0
        %610 = vmatpush1.xpose.msra.mxu0 0.0
        %611 = vmatprep.subr.mxu0 0.0
        %612 = vmatpush1.xpose.msra.mxu0 0.0
        %613 = vmatprep.subr.mxu0 0.0
        %614 = vmatpush1.xpose.msra.mxu0 0.0
        %615 = vmatprep.subr.mxu0 0.0
        %616 = vmatpush1.xpose.msra.mxu0 0.0
        %617 = vmatprep.subr.mxu0 0.0
        %618 = vmatpush1.xpose.msra.mxu0 0.0
        %619 = vmatprep.subr.mxu0 0.0
        %620 = vmatpush1.xpose.msra.mxu0 %v587
        %621 = vmatprep.subr.mxu0 0.0
        %622 = vmatpush2.xpose.msra.mxu0 0.0
        %623 = vmatprep.subr.mxu0 0.0
        %624 = vmatpush2.xpose.msra.mxu0 0.0
        %625 = vmatprep.subr.mxu0 0.0
        %626 = vmatpush2.xpose.msra.mxu0 0.0
        %627 = vmatprep.subr.mxu0 0.0
        %628 = vmatpush2.xpose.msra.mxu0 0.0
        %629 = vmatprep.subr.mxu0 0.0
        %630 = vmatpush2.xpose.msra.mxu0 0.0
        %631 = vmatprep.subr.mxu0 0.0
        %632 = vmatpush2.xpose.msra.mxu0 0.0
        %633 = vmatprep.subr.mxu0 0.0
        %634 = vmatpush2.xpose.msra.mxu0 0.0
        %635 = vmatprep.subr.mxu0 0.0
        %636 = vmatpush2.xpose.msra.mxu0 0.0
        %637 = vmatprep.subr.mxu0 0.0
        %638 = vmatpush2.xpose.msra.mxu0 0.0
        %639 = vmatprep.subr.mxu0 0.0
        %640 = vmatpush2.xpose.msra.mxu0 0.0
        %641 = vmatprep.subr.mxu0 0.0
        %642 = vmatpush2.xpose.msra.mxu0 0.0
        %643 = vmatprep.subr.mxu0 0.0
        %644 = vmatpush2.xpose.msra.mxu0 0.0
        %645 = vmatprep.subr.mxu0 0.0
        %646 = vmatpush2.xpose.msra.mxu0 0.0
        %647 = vmatprep.subr.mxu0 0.0
        %648 = vmatpush2.xpose.msra.mxu0 0.0
        %649 = vmatprep.subr.mxu0 0.0
        %650 = vmatpush2.xpose.msra.mxu0 0.0
        %651 = vmatprep.subr.mxu0 0.0
        %652 = vmatpush2.xpose.msra.mxu0 0.0
        %653 = vmatprep.mubr.f32.mxu0 0.0
        %654 = vmatmul.mubr.f32.gmra.mxu0 %v585
        %v655 = vpop.f32.mrf.mxu0
        %v656 = vadd.f32 0.0, %v655
        %v657 = vpop.f32.mrf.mxu0
        %658 = vdwg.mxu0
        %v659 = vmul.f32 %v656, 0.35355338
        %v660 = vsel %vm495, %v659, -inf
        %661 = vmax.xlane.f32.xlu0 %v660
        %v662 = vpop.xlane.xlu0 %661
        %v663 = vsub.f32 %v659, %v662
        %v664 = vmul.f32 %v663, 1.442695
        %v665 = vpow.pop %v664
        %v666 = vsel %vm495, %v665, 0.0
        %667 = vadd.xlane.f32.xlu0 %v666
        %v668 = vpop.xlane.xlu0 %667
        %v669 = vrcp.pop %v668
        %v670 = vmul.f32 %v665, %v669
        %672 = vrot.lane.b32.xlu0 %v414, 120
        %v673 = vpop.permute.xlu0 %672
        %v676 = vsel %vm417, %v670, 0
        %678 = vmatprep.subr.mxu0 0.0
        %679 = vmatpush1.msra.mxu0 0.0
        %680 = vmatprep.subr.mxu0 0.0
        %681 = vmatpush1.msra.mxu0 0.0
        %682 = vmatprep.subr.mxu0 0.0
        %683 = vmatpush1.msra.mxu0 0.0
        %684 = vmatprep.subr.mxu0 0.0
        %685 = vmatpush1.msra.mxu0 0.0
        %686 = vmatprep.subr.mxu0 0.0
        %687 = vmatpush1.msra.mxu0 0.0
        %688 = vmatprep.subr.mxu0 0.0
        %689 = vmatpush1.msra.mxu0 0.0
        %690 = vmatprep.subr.mxu0 0.0
        %691 = vmatpush1.msra.mxu0 0.0
        %692 = vmatprep.subr.mxu0 0.0
        %693 = vmatpush1.msra.mxu0 0.0
        %694 = vmatprep.subr.mxu0 0.0
        %695 = vmatpush1.msra.mxu0 0.0
        %696 = vmatprep.subr.mxu0 0.0
        %697 = vmatpush1.msra.mxu0 0.0
        %698 = vmatprep.subr.mxu0 0.0
        %699 = vmatpush1.msra.mxu0 0.0
        %700 = vmatprep.subr.mxu0 0.0
        %701 = vmatpush1.msra.mxu0 0.0
        %702 = vmatprep.subr.mxu0 0.0
        %703 = vmatpush1.msra.mxu0 0.0
        %704 = vmatprep.subr.mxu0 0.0
        %705 = vmatpush1.msra.mxu0 0.0
        %706 = vmatprep.subr.mxu0 0.0
        %707 = vmatpush1.msra.mxu0 0.0
        %708 = vmatprep.subr.mxu0 0.0
        %709 = vmatpush1.msra.mxu0 %v673
        %710 = vmatprep.subr.mxu0 0.0
        %711 = vmatpush2.msra.mxu0 0.0
        %712 = vmatprep.subr.mxu0 0.0
        %713 = vmatpush2.msra.mxu0 0.0
        %714 = vmatprep.subr.mxu0 0.0
        %715 = vmatpush2.msra.mxu0 0.0
        %716 = vmatprep.subr.mxu0 0.0
        %717 = vmatpush2.msra.mxu0 0.0
        %718 = vmatprep.subr.mxu0 0.0
        %719 = vmatpush2.msra.mxu0 0.0
        %720 = vmatprep.subr.mxu0 0.0
        %721 = vmatpush2.msra.mxu0 0.0
        %722 = vmatprep.subr.mxu0 0.0
        %723 = vmatpush2.msra.mxu0 0.0
        %724 = vmatprep.subr.mxu0 0.0
        %725 = vmatpush2.msra.mxu0 0.0
        %726 = vmatprep.subr.mxu0 0.0
        %727 = vmatpush2.msra.mxu0 0.0
        %728 = vmatprep.subr.mxu0 0.0
        %729 = vmatpush2.msra.mxu0 0.0
        %730 = vmatprep.subr.mxu0 0.0
        %731 = vmatpush2.msra.mxu0 0.0
        %732 = vmatprep.subr.mxu0 0.0
        %733 = vmatpush2.msra.mxu0 0.0
        %734 = vmatprep.subr.mxu0 0.0
        %735 = vmatpush2.msra.mxu0 0.0
        %736 = vmatprep.subr.mxu0 0.0
        %737 = vmatpush2.msra.mxu0 0.0
        %738 = vmatprep.subr.mxu0 0.0
        %739 = vmatpush2.msra.mxu0 0.0
        %740 = vmatprep.subr.mxu0 0.0
        %741 = vmatpush2.msra.mxu0 0.0
        %742 = vmatprep.mubr.f32.mxu0 0.0
        %743 = vmatmul.mubr.f32.gmra.mxu0 %v676
        %v744 = vpop.f32.mrf.mxu0
        %v745 = vadd.f32 0.0, %v744
        %v746 = vpop.f32.mrf.mxu0
        %747 = vdwg.mxu0
        %749 = vrot.lane.b32.xlu0 %v745, 8
        %v750 = vpop.permute.xlu0 %749
        %v752 = vadd.f32 %v263, %v750
        %753 = vrot.lane.b32.xlu0 %v263, 112
        %v754 = vpop.permute.xlu0 %753
        %755 = vrot.lane.b32.xlu0 %v340, 112
        %v756 = vpop.permute.xlu0 %755
        %v757 = vsel %vm417, %v754, 0
        %v759 = vsel %vm417, %v756, 0
        %761 = vmatprep.subr.mxu0 0.0
        %762 = vmatpush1.xpose.msra.mxu0 0.0
        %763 = vmatprep.subr.mxu0 0.0
        %764 = vmatpush1.xpose.msra.mxu0 0.0
        %765 = vmatprep.subr.mxu0 0.0
        %766 = vmatpush1.xpose.msra.mxu0 0.0
        %767 = vmatprep.subr.mxu0 0.0
        %768 = vmatpush1.xpose.msra.mxu0 0.0
        %769 = vmatprep.subr.mxu0 0.0
        %770 = vmatpush1.xpose.msra.mxu0 0.0
        %771 = vmatprep.subr.mxu0 0.0
        %772 = vmatpush1.xpose.msra.mxu0 0.0
        %773 = vmatprep.subr.mxu0 0.0
        %774 = vmatpush1.xpose.msra.mxu0 0.0
        %775 = vmatprep.subr.mxu0 0.0
        %776 = vmatpush1.xpose.msra.mxu0 0.0
        %777 = vmatprep.subr.mxu0 0.0
        %778 = vmatpush1.xpose.msra.mxu0 0.0
        %779 = vmatprep.subr.mxu0 0.0
        %780 = vmatpush1.xpose.msra.mxu0 0.0
        %781 = vmatprep.subr.mxu0 0.0
        %782 = vmatpush1.xpose.msra.mxu0 0.0
        %783 = vmatprep.subr.mxu0 0.0
        %784 = vmatpush1.xpose.msra.mxu0 0.0
        %785 = vmatprep.subr.mxu0 0.0
        %786 = vmatpush1.xpose.msra.mxu0 0.0
        %787 = vmatprep.subr.mxu0 0.0
        %788 = vmatpush1.xpose.msra.mxu0 0.0
        %789 = vmatprep.subr.mxu0 0.0
        %790 = vmatpush1.xpose.msra.mxu0 0.0
        %791 = vmatprep.subr.mxu0 0.0
        %792 = vmatpush1.xpose.msra.mxu0 %v759
        %793 = vmatprep.subr.mxu0 0.0
        %794 = vmatpush2.xpose.msra.mxu0 0.0
        %795 = vmatprep.subr.mxu0 0.0
        %796 = vmatpush2.xpose.msra.mxu0 0.0
        %797 = vmatprep.subr.mxu0 0.0
        %798 = vmatpush2.xpose.msra.mxu0 0.0
        %799 = vmatprep.subr.mxu0 0.0
        %800 = vmatpush2.xpose.msra.mxu0 0.0
        %801 = vmatprep.subr.mxu0 0.0
        %802 = vmatpush2.xpose.msra.mxu0 0.0
        %803 = vmatprep.subr.mxu0 0.0
        %804 = vmatpush2.xpose.msra.mxu0 0.0
        %805 = vmatprep.subr.mxu0 0.0
        %806 = vmatpush2.xpose.msra.mxu0 0.0
        %807 = vmatprep.subr.mxu0 0.0
        %808 = vmatpush2.xpose.msra.mxu0 0.0
        %809 = vmatprep.subr.mxu0 0.0
        %810 = vmatpush2.xpose.msra.mxu0 0.0
        %811 = vmatprep.subr.mxu0 0.0
        %812 = vmatpush2.xpose.msra.mxu0 0.0
        %813 = vmatprep.subr.mxu0 0.0
        %814 = vmatpush2.xpose.msra.mxu0 0.0
        %815 = vmatprep.subr.mxu0 0.0
        %816 = vmatpush2.xpose.msra.mxu0 0.0
        %817 = vmatprep.subr.mxu0 0.0
        %818 = vmatpush2.xpose.msra.mxu0 0.0
        %819 = vmatprep.subr.mxu0 0.0
        %820 = vmatpush2.xpose.msra.mxu0 0.0
        %821 = vmatprep.subr.mxu0 0.0
        %822 = vmatpush2.xpose.msra.mxu0 0.0
        %823 = vmatprep.subr.mxu0 0.0
        %824 = vmatpush2.xpose.msra.mxu0 0.0
        %825 = vmatprep.mubr.f32.mxu0 0.0
        %826 = vmatmul.mubr.f32.gmra.mxu0 %v757
        %v827 = vpop.f32.mrf.mxu0
        %v828 = vadd.f32 0.0, %v827
        %v829 = vpop.f32.mrf.mxu0
        %830 = vdwg.mxu0
        %v831 = vmul.f32 %v828, 0.35355338
        %v832 = vsel %vm495, %v831, -inf
        %833 = vmax.xlane.f32.xlu0 %v832
        %v834 = vpop.xlane.xlu0 %833
        %v835 = vsub.f32 %v831, %v834
        %v836 = vmul.f32 %v835, 1.442695
        %v837 = vpow.pop %v836
        %v838 = vsel %vm495, %v837, 0.0
        %839 = vadd.xlane.f32.xlu0 %v838
        %v840 = vpop.xlane.xlu0 %839
        %v841 = vrcp.pop %v840
        %v842 = vmul.f32 %v837, %v841
        %843 = vrot.lane.b32.xlu0 %v414, 112
        %v844 = vpop.permute.xlu0 %843
        %v847 = vsel %vm417, %v842, 0
        %849 = vmatprep.subr.mxu0 0.0
        %850 = vmatpush1.msra.mxu0 0.0
        %851 = vmatprep.subr.mxu0 0.0
        %852 = vmatpush1.msra.mxu0 0.0
        %853 = vmatprep.subr.mxu0 0.0
        %854 = vmatpush1.msra.mxu0 0.0
        %855 = vmatprep.subr.mxu0 0.0
        %856 = vmatpush1.msra.mxu0 0.0
        %857 = vmatprep.subr.mxu0 0.0
        %858 = vmatpush1.msra.mxu0 0.0
        %859 = vmatprep.subr.mxu0 0.0
        %860 = vmatpush1.msra.mxu0 0.0
        %861 = vmatprep.subr.mxu0 0.0
        %862 = vmatpush1.msra.mxu0 0.0
        %863 = vmatprep.subr.mxu0 0.0
        %864 = vmatpush1.msra.mxu0 0.0
        %865 = vmatprep.subr.mxu0 0.0
        %866 = vmatpush1.msra.mxu0 0.0
        %867 = vmatprep.subr.mxu0 0.0
        %868 = vmatpush1.msra.mxu0 0.0
        %869 = vmatprep.subr.mxu0 0.0
        %870 = vmatpush1.msra.mxu0 0.0
        %871 = vmatprep.subr.mxu0 0.0
        %872 = vmatpush1.msra.mxu0 0.0
        %873 = vmatprep.subr.mxu0 0.0
        %874 = vmatpush1.msra.mxu0 0.0
        %875 = vmatprep.subr.mxu0 0.0
        %876 = vmatpush1.msra.mxu0 0.0
        %877 = vmatprep.subr.mxu0 0.0
        %878 = vmatpush1.msra.mxu0 0.0
        %879 = vmatprep.subr.mxu0 0.0
        %880 = vmatpush1.msra.mxu0 %v844
        %881 = vmatprep.subr.mxu0 0.0
        %882 = vmatpush2.msra.mxu0 0.0
        %883 = vmatprep.subr.mxu0 0.0
        %884 = vmatpush2.msra.mxu0 0.0
        %885 = vmatprep.subr.mxu0 0.0
        %886 = vmatpush2.msra.mxu0 0.0
        %887 = vmatprep.subr.mxu0 0.0
        %888 = vmatpush2.msra.mxu0 0.0
        %889 = vmatprep.subr.mxu0 0.0
        %890 = vmatpush2.msra.mxu0 0.0
        %891 = vmatprep.subr.mxu0 0.0
        %892 = vmatpush2.msra.mxu0 0.0
        %893 = vmatprep.subr.mxu0 0.0
        %894 = vmatpush2.msra.mxu0 0.0
        %895 = vmatprep.subr.mxu0 0.0
        %896 = vmatpush2.msra.mxu0 0.0
        %897 = vmatprep.subr.mxu0 0.0
        %898 = vmatpush2.msra.mxu0 0.0
        %899 = vmatprep.subr.mxu0 0.0
        %900 = vmatpush2.msra.mxu0 0.0
        %901 = vmatprep.subr.mxu0 0.0
        %902 = vmatpush2.msra.mxu0 0.0
        %903 = vmatprep.subr.mxu0 0.0
        %904 = vmatpush2.msra.mxu0 0.0
        %905 = vmatprep.subr.mxu0 0.0
        %906 = vmatpush2.msra.mxu0 0.0
        %907 = vmatprep.subr.mxu0 0.0
        %908 = vmatpush2.msra.mxu0 0.0
        %909 = vmatprep.subr.mxu0 0.0
        %910 = vmatpush2.msra.mxu0 0.0
        %911 = vmatprep.subr.mxu0 0.0
        %912 = vmatpush2.msra.mxu0 0.0
        %913 = vmatprep.mubr.f32.mxu0 0.0
        %914 = vmatmul.mubr.f32.gmra.mxu0 %v847
        %v915 = vpop.f32.mrf.mxu0
        %v916 = vadd.f32 0.0, %v915
        %v917 = vpop.f32.mrf.mxu0
        %918 = vdwg.mxu0
        %920 = vrot.lane.b32.xlu0 %v916, 16
        %v921 = vpop.permute.xlu0 %920
        %v923 = vadd.f32 %v263, %v921
        %924 = vrot.lane.b32.xlu0 %v263, 104
        %v925 = vpop.permute.xlu0 %924
        %926 = vrot.lane.b32.xlu0 %v340, 104
        %v927 = vpop.permute.xlu0 %926
        %v928 = vsel %vm417, %v925, 0
        %v930 = vsel %vm417, %v927, 0
        %932 = vmatprep.subr.mxu0 0.0
        %933 = vmatpush1.xpose.msra.mxu0 0.0
        %934 = vmatprep.subr.mxu0 0.0
        %935 = vmatpush1.xpose.msra.mxu0 0.0
        %936 = vmatprep.subr.mxu0 0.0
        %937 = vmatpush1.xpose.msra.mxu0 0.0
        %938 = vmatprep.subr.mxu0 0.0
        %939 = vmatpush1.xpose.msra.mxu0 0.0
        %940 = vmatprep.subr.mxu0 0.0
        %941 = vmatpush1.xpose.msra.mxu0 0.0
        %942 = vmatprep.subr.mxu0 0.0
        %943 = vmatpush1.xpose.msra.mxu0 0.0
        %944 = vmatprep.subr.mxu0 0.0
        %945 = vmatpush1.xpose.msra.mxu0 0.0
        %946 = vmatprep.subr.mxu0 0.0
        %947 = vmatpush1.xpose.msra.mxu0 0.0
        %948 = vmatprep.subr.mxu0 0.0
        %949 = vmatpush1.xpose.msra.mxu0 0.0
        %950 = vmatprep.subr.mxu0 0.0
        %951 = vmatpush1.xpose.msra.mxu0 0.0
        %952 = vmatprep.subr.mxu0 0.0
        %953 = vmatpush1.xpose.msra.mxu0 0.0
        %954 = vmatprep.subr.mxu0 0.0
        %955 = vmatpush1.xpose.msra.mxu0 0.0
        %956 = vmatprep.subr.mxu0 0.0
        %957 = vmatpush1.xpose.msra.mxu0 0.0
        %958 = vmatprep.subr.mxu0 0.0
        %959 = vmatpush1.xpose.msra.mxu0 0.0
        %960 = vmatprep.subr.mxu0 0.0
        %961 = vmatpush1.xpose.msra.mxu0 0.0
        %962 = vmatprep.subr.mxu0 0.0
        %963 = vmatpush1.xpose.msra.mxu0 %v930
        %964 = vmatprep.subr.mxu0 0.0
        %965 = vmatpush2.xpose.msra.mxu0 0.0
        %966 = vmatprep.subr.mxu0 0.0
        %967 = vmatpush2.xpose.msra.mxu0 0.0
        %968 = vmatprep.subr.mxu0 0.0
        %969 = vmatpush2.xpose.msra.mxu0 0.0
        %970 = vmatprep.subr.mxu0 0.0
        %971 = vmatpush2.xpose.msra.mxu0 0.0
        %972 = vmatprep.subr.mxu0 0.0
        %973 = vmatpush2.xpose.msra.mxu0 0.0
        %974 = vmatprep.subr.mxu0 0.0
        %975 = vmatpush2.xpose.msra.mxu0 0.0
        %976 = vmatprep.subr.mxu0 0.0
        %977 = vmatpush2.xpose.msra.mxu0 0.0
        %978 = vmatprep.subr.mxu0 0.0
        %979 = vmatpush2.xpose.msra.mxu0 0.0
        %980 = vmatprep.subr.mxu0 0.0
        %981 = vmatpush2.xpose.msra.mxu0 0.0
        %982 = vmatprep.subr.mxu0 0.0
        %983 = vmatpush2.xpose.msra.mxu0 0.0
        %984 = vmatprep.subr.mxu0 0.0
        %985 = vmatpush2.xpose.msra.mxu0 0.0
        %986 = vmatprep.subr.mxu0 0.0
        %987 = vmatpush2.xpose.msra.mxu0 0.0
        %988 = vmatprep.subr.mxu0 0.0
        %989 = vmatpush2.xpose.msra.mxu0 0.0
        %990 = vmatprep.subr.mxu0 0.0
        %991 = vmatpush2.xpose.msra.mxu0 0.0
        %992 = vmatprep.subr.mxu0 0.0
        %993 = vmatpush2.xpose.msra.mxu0 0.0
        %994 = vmatprep.subr.mxu0 0.0
        %995 = vmatpush2.xpose.msra.mxu0 0.0
        %996 = vmatprep.mubr.f32.mxu0 0.0
        %997 = vmatmul.mubr.f32.gmra.mxu0 %v928
        %v998 = vpop.f32.mrf.mxu0
        %v999 = vadd.f32 0.0, %v998
        %v1000 = vpop.f32.mrf.mxu0
        %1001 = vdwg.mxu0
        %v1002 = vmul.f32 %v999, 0.35355338
        %v1003 = vsel %vm495, %v1002, -inf
        %1004 = vmax.xlane.f32.xlu0 %v1003
        %v1005 = vpop.xlane.xlu0 %1004
        %v1006 = vsub.f32 %v1002, %v1005
        %v1007 = vmul.f32 %v1006, 1.442695
        %v1008 = vpow.pop %v1007
        %v1009 = vsel %vm495, %v1008, 0.0
        %1010 = vadd.xlane.f32.xlu0 %v1009
        %v1011 = vpop.xlane.xlu0 %1010
        %v1012 = vrcp.pop %v1011
        %v1013 = vmul.f32 %v1008, %v1012
        %1014 = vrot.lane.b32.xlu0 %v414, 104
        %v1015 = vpop.permute.xlu0 %1014
        %v1018 = vsel %vm417, %v1013, 0
        %1020 = vmatprep.subr.mxu0 0.0
        %1021 = vmatpush1.msra.mxu0 0.0
        %1022 = vmatprep.subr.mxu0 0.0
        %1023 = vmatpush1.msra.mxu0 0.0
        %1024 = vmatprep.subr.mxu0 0.0
        %1025 = vmatpush1.msra.mxu0 0.0
        %1026 = vmatprep.subr.mxu0 0.0
        %1027 = vmatpush1.msra.mxu0 0.0
        %1028 = vmatprep.subr.mxu0 0.0
        %1029 = vmatpush1.msra.mxu0 0.0
        %1030 = vmatprep.subr.mxu0 0.0
        %1031 = vmatpush1.msra.mxu0 0.0
        %1032 = vmatprep.subr.mxu0 0.0
        %1033 = vmatpush1.msra.mxu0 0.0
        %1034 = vmatprep.subr.mxu0 0.0
        %1035 = vmatpush1.msra.mxu0 0.0
        %1036 = vmatprep.subr.mxu0 0.0
        %1037 = vmatpush1.msra.mxu0 0.0
        %1038 = vmatprep.subr.mxu0 0.0
        %1039 = vmatpush1.msra.mxu0 0.0
        %1040 = vmatprep.subr.mxu0 0.0
        %1041 = vmatpush1.msra.mxu0 0.0
        %1042 = vmatprep.subr.mxu0 0.0
        %1043 = vmatpush1.msra.mxu0 0.0
        %1044 = vmatprep.subr.mxu0 0.0
        %1045 = vmatpush1.msra.mxu0 0.0
        %1046 = vmatprep.subr.mxu0 0.0
        %1047 = vmatpush1.msra.mxu0 0.0
        %1048 = vmatprep.subr.mxu0 0.0
        %1049 = vmatpush1.msra.mxu0 0.0
        %1050 = vmatprep.subr.mxu0 0.0
        %1051 = vmatpush1.msra.mxu0 %v1015
        %1052 = vmatprep.subr.mxu0 0.0
        %1053 = vmatpush2.msra.mxu0 0.0
        %1054 = vmatprep.subr.mxu0 0.0
        %1055 = vmatpush2.msra.mxu0 0.0
        %1056 = vmatprep.subr.mxu0 0.0
        %1057 = vmatpush2.msra.mxu0 0.0
        %1058 = vmatprep.subr.mxu0 0.0
        %1059 = vmatpush2.msra.mxu0 0.0
        %1060 = vmatprep.subr.mxu0 0.0
        %1061 = vmatpush2.msra.mxu0 0.0
        %1062 = vmatprep.subr.mxu0 0.0
        %1063 = vmatpush2.msra.mxu0 0.0
        %1064 = vmatprep.subr.mxu0 0.0
        %1065 = vmatpush2.msra.mxu0 0.0
        %1066 = vmatprep.subr.mxu0 0.0
        %1067 = vmatpush2.msra.mxu0 0.0
        %1068 = vmatprep.subr.mxu0 0.0
        %1069 = vmatpush2.msra.mxu0 0.0
        %1070 = vmatprep.subr.mxu0 0.0
        %1071 = vmatpush2.msra.mxu0 0.0
        %1072 = vmatprep.subr.mxu0 0.0
        %1073 = vmatpush2.msra.mxu0 0.0
        %1074 = vmatprep.subr.mxu0 0.0
        %1075 = vmatpush2.msra.mxu0 0.0
        %1076 = vmatprep.subr.mxu0 0.0
        %1077 = vmatpush2.msra.mxu0 0.0
        %1078 = vmatprep.subr.mxu0 0.0
        %1079 = vmatpush2.msra.mxu0 0.0
        %1080 = vmatprep.subr.mxu0 0.0
        %1081 = vmatpush2.msra.mxu0 0.0
        %1082 = vmatprep.subr.mxu0 0.0
        %1083 = vmatpush2.msra.mxu0 0.0
        %1084 = vmatprep.mubr.f32.mxu0 0.0
        %1085 = vmatmul.mubr.f32.gmra.mxu0 %v1018
        %v1086 = vpop.f32.mrf.mxu0
        %v1087 = vadd.f32 0.0, %v1086
        %v1088 = vpop.f32.mrf.mxu0
        %1089 = vdwg.mxu0
        %1091 = vrot.lane.b32.xlu0 %v1087, 24
        %v1092 = vpop.permute.xlu0 %1091
        %v1094 = vadd.f32 %v263, %v1092
        %v1095 = vsel %vm417, %v580, %v752
        %vm1096 = vcmask 130048
        %v1097 = vsel %vm1096, %v1095, %v923
        %vm1098 = vcmask 195584
        %v1099 = vsel %vm1098, %v1097, %v1094
        %v1100 = vlaneseq
        %v1101 = vshrl.u32 %v1100, 7
        %v1102 = vsub.s32 0, %v1101
        %v1103 = vrot.slane %v185, %v1102
        %v1105 = vsel %vm192, %v1099, 0
        %1107 = vmatprep.subr.mxu0 0.0
        %1108 = vmatpush1.msra.mxu0 0.0
        %1109 = vmatprep.subr.mxu0 0.0
        %1110 = vmatpush1.msra.mxu0 0.0
        %1111 = vmatprep.subr.mxu0 0.0
        %1112 = vmatpush1.msra.mxu0 0.0
        %1113 = vmatprep.subr.mxu0 0.0
        %1114 = vmatpush1.msra.mxu0 0.0
        %1115 = vmatprep.subr.mxu0 0.0
        %1116 = vmatpush1.msra.mxu0 0.0
        %1117 = vmatprep.subr.mxu0 0.0
        %1118 = vmatpush1.msra.mxu0 0.0
        %1119 = vmatprep.subr.mxu0 0.0
        %1120 = vmatpush1.msra.mxu0 0.0
        %1121 = vmatprep.subr.mxu0 0.0
        %1122 = vmatpush1.msra.mxu0 0.0
        %1123 = vmatprep.subr.mxu0 0.0
        %1124 = vmatpush1.msra.mxu0 0.0
        %1125 = vmatprep.subr.mxu0 0.0
        %1126 = vmatpush1.msra.mxu0 0.0
        %1127 = vmatprep.subr.mxu0 0.0
        %1128 = vmatpush1.msra.mxu0 0.0
        %1129 = vmatprep.subr.mxu0 0.0
        %1130 = vmatpush1.msra.mxu0 0.0
        %1131 = vmatprep.subr.mxu0 0.0
        %1132 = vmatpush1.msra.mxu0 %v181
        %1133 = vmatprep.subr.mxu0 0.0
        %1134 = vmatpush1.msra.mxu0 %v180
        %1135 = vmatprep.subr.mxu0 0.0
        %1136 = vmatpush1.msra.mxu0 %v179
        %1137 = vmatprep.subr.mxu0 0.0
        %1138 = vmatpush1.msra.mxu0 %v178
        %1139 = vmatprep.subr.mxu0 0.0
        %1140 = vmatpush2.msra.mxu0 0.0
        %1141 = vmatprep.subr.mxu0 0.0
        %1142 = vmatpush2.msra.mxu0 0.0
        %1143 = vmatprep.subr.mxu0 0.0
        %1144 = vmatpush2.msra.mxu0 0.0
        %1145 = vmatprep.subr.mxu0 0.0
        %1146 = vmatpush2.msra.mxu0 0.0
        %1147 = vmatprep.subr.mxu0 0.0
        %1148 = vmatpush2.msra.mxu0 0.0
        %1149 = vmatprep.subr.mxu0 0.0
        %1150 = vmatpush2.msra.mxu0 0.0
        %1151 = vmatprep.subr.mxu0 0.0
        %1152 = vmatpush2.msra.mxu0 0.0
        %1153 = vmatprep.subr.mxu0 0.0
        %1154 = vmatpush2.msra.mxu0 0.0
        %1155 = vmatprep.subr.mxu0 0.0
        %1156 = vmatpush2.msra.mxu0 0.0
        %1157 = vmatprep.subr.mxu0 0.0
        %1158 = vmatpush2.msra.mxu0 0.0
        %1159 = vmatprep.subr.mxu0 0.0
        %1160 = vmatpush2.msra.mxu0 0.0
        %1161 = vmatprep.subr.mxu0 0.0
        %1162 = vmatpush2.msra.mxu0 0.0
        %1163 = vmatprep.subr.mxu0 0.0
        %1164 = vmatpush2.msra.mxu0 0.0
        %1165 = vmatprep.subr.mxu0 0.0
        %1166 = vmatpush2.msra.mxu0 0.0
        %1167 = vmatprep.subr.mxu0 0.0
        %1168 = vmatpush2.msra.mxu0 0.0
        %1169 = vmatprep.subr.mxu0 0.0
        %1170 = vmatpush2.msra.mxu0 0.0
        %1171 = vmatprep.mubr.f32.mxu0 0.0
        %1172 = vmatmul.mubr.f32.gmra.mxu0 %v1105
        %v1173 = vpop.f32.mrf.mxu0
        %v1174 = vadd.f32 %v1103, %v1173
        %v1175 = vpop.f32.mrf.mxu0
        %1176 = vdwg.mxu0
        %v1177 = vmax.f32 %v1174, 0.0
        %v1178 = vadd.f32 %v1099, %v1177
        %vm1179 = vcmask 257024
        %1180 = vst.msk [vmem:[%s161] sm:$0xf] %vm1179, %v1178
        %s1181 = sand.u32 %s93, 1
        %s1182 = scalar_lea.sflag [#allocation3], %s1181
        %s1183 = sand.u32 %s93, 1
        %s1184 = smul.addr %s1183, 4
        %s1185 = scalar_lea.vmem [#allocation2], %s1184
        // Predicated region
        $region33: #{tpu_custom_call.1} parent=31 // pred_check
          %p1186 = pneg %p103
        $region34: #{tpu_custom_call.1} parent=31 // pred_check_branch
          %1188 = sbr.rel (%p1186) target = $region36
        $region35: #{tpu_custom_call.1} parent=31 // pred_region
          %s1190 = ssub.s32 64, 64
          %1191 = vsyncadd %s1182, %s1190
          %s1192 = smul.addr %s17, 64
          %s1193 = scalar_lea.hbm %s3, %s1192
          %s1195 = sshll.u32 %s1185, 4
          %s1196 = int_to_ptr.vmem [resolvable:$true] %s1195
          %1198 = dma.vmem_to_hbm [thread:$0]  %s1196, 64, %s1193, %s1182
        $region36: #{tpu_custom_call.1} parent=31 // pred_fallthru
          _
      $region32: #{tpu_custom_call.1} parent=5 // pred_fallthru
        _
      %p1199 = scmp.le.s32.totalorder 2, %s12
      // Predicated region
      $region37: #{tpu_custom_call.1} parent=5 // pred_check
        %p1200 = pneg %p1199
      $region38: #{tpu_custom_call.1} parent=5 // pred_check_branch
        %1202 = sbr.rel (%p1200) target = $region40
      $region39: #{tpu_custom_call.1} parent=5 // pred_region
        %s1203 = ssub.s32 %s12, 2
        // Predicated region
        $region41: #{tpu_custom_call.1} parent=39 // pred_check
          %p1204 = pneg %p109
        $region42: #{tpu_custom_call.1} parent=39 // pred_check_branch
          %1206 = sbr.rel (%p1204) target = $region44
        $region43: #{tpu_custom_call.1} parent=39 // pred_region
          %s1207 = sand.u32 %s94, 1
          %s1208 = scalar_lea.sflag [#allocation3], %s1207
          %s1209 = sand.u32 %s94, 1
          %s1210 = smul.addr %s1209, 4
          %s1211 = scalar_lea.vmem [#allocation2], %s1210
          %1212 = dma.done %s1208, 64
        $region44: #{tpu_custom_call.1} parent=39 // pred_fallthru
          _
      $region40: #{tpu_custom_call.1} parent=5 // pred_fallthru
        _
    $region6: #{tpu_custom_call.1} parent=1 // loop_footer
      %s16 = sadd.s32 1, %s12
    $region7: #{tpu_custom_call.1} parent=1 // loop_footer_branch
      %11 = sbr.rel target = $region3
    $region8: #{tpu_custom_call.1} parent=1 // loop_exit
      _
    %1213 = vsyncpa [#allocation3], 1
    %s1214 = scalar_lea.sflag [#allocation3], 1
    %1215 = vsyncpa %s1214, 1

</llo_original>
